<compile_context>
chip_gen: v7x
topology: tpu7x:2x2x1
jax: 0.10.0
libtpu: 0.0.40
codegen_flags: <defaults>
</compile_context>

<pallas_src>
import functools

import jax
import jax.numpy as jnp
from jax.experimental import pallas as pl
from jax.experimental.pallas import tpu as pltpu
import numpy as np


def _rup(n, m):
    return ((n + m - 1) // m) * m


def _lstm_netconf_kernel(x_ref,       # (T*BP, I)   time-major, batch padded
                         p_ref,       # (rows, L)   packed constant operands
                         o_ref,       # (BP, L)     lane-padded output
                         *, T, BP, I, H,
                         off_wih, off_whh, off_b, off_wfc, off_bfc):
    G = 4 * H

    # Loop-invariant parameter loads from the packed buffer. Every segment
    # starts on an 8-row boundary, so these static slices are tile-aligned.
    wih = p_ref[off_wih:off_wih + I, 0:G]          # (I, 4H)  gate-permuted W_ih^T
    whh = p_ref[off_whh:off_whh + H, 0:G]          # (H, 4H)  gate-permuted W_hh^T
    b = p_ref[off_b:off_b + 1, 0:G]                # (1, 4H)  b_ih + b_hh
    wfc = p_ref[off_wfc:off_wfc + H, :]            # (H, L)   fused fc1..fc4 weight
    bfc = p_ref[off_bfc:off_bfc + 1, :]            # (1, L)   fused fc1..fc4 bias

    # Hoisted input projection: one MXU matmul covering every timestep. Only
    # h @ W_hh^T remains on the serial per-step critical path.
    xproj = jnp.dot(x_ref[...], wih,
                    preferred_element_type=jnp.float32) + b        # (T*BP, 4H)

    h = jnp.zeros((BP, H), jnp.float32)
    c = jnp.zeros((BP, H), jnp.float32)

    # Fully unrolled recurrence (T is static and small). `whh` is loaded once
    # and is loop-invariant, letting Mosaic keep the MXU RHS resident across
    # the unrolled jnp.dot calls.
    # TODO(synk): explicit pltpu.matmul_push_rhs/matmul_acc_lhs (and MRB
    # accumulation on v7x) could remove the remaining RHS-push latency.
    for t in range(T):
        # BP == 8: each timestep slab is exactly one f32 vreg, sublane aligned.
        gates = xproj[t * BP:(t + 1) * BP, :] + jnp.dot(
            h, whh, preferred_element_type=jnp.float32)            # (BP, 4H)
        # One full-vreg sigmoid. Gate layout [ i | f | o | g ]; the g columns
        # were pre-scaled by 2 in the wrapper, so tanh(g) = 2*sigmoid(2g) - 1.
        sig = jax.nn.sigmoid(gates)
        i_g = sig[:, 0 * H:1 * H]
        f_g = sig[:, 1 * H:2 * H]
        o_g = sig[:, 2 * H:3 * H]
        g_g = 2.0 * sig[:, 3 * H:4 * H] - 1.0
        c = f_g * c + i_g * g_g
        h = o_g * jnp.tanh(c)

    # Fused fc1..fc4 tail: single matmul + bias. Lane-padded so the final
    # write is an unmasked full-width store.
    o_ref[...] = (jnp.dot(h, wfc, preferred_element_type=jnp.float32)
                  + bfc).astype(o_ref.dtype)


def init_params(key, input_size, hidden_size, output_size):
    """Deterministic synthetic parameters with PyTorch-default-like uniform init."""
    half = int(input_size / 2)
    ks = jax.random.split(key, 12)

    def u(k, shape, fan):
        bound = 1.0 / np.sqrt(fan)
        return jax.random.uniform(k, shape, jnp.float32, -bound, bound)

    H, I, O = hidden_size, input_size, output_size
    params = dict(
        w_ih=u(ks[0], (4 * H, I), H),
        w_hh=u(ks[1], (4 * H, H), H),
        b_ih=u(ks[2], (4 * H,), H),
        b_hh=u(ks[3], (4 * H,), H),
        w1=u(ks[4], (I, H), H),        b1=u(ks[5], (I,), H),
        w2=u(ks[6], (half, I), I),     b2=u(ks[7], (half,), I),
        w3=u(ks[8], (5, half), half),  b3=u(ks[9], (5,), half),
        w4=u(ks[10], (O, 5), 5),       b4=u(ks[11], (O,), 5),
    )
    return params


def lstm_netconf_forward(x, params):
    """x: (B, T, input_size) float32 -> (B, output_size) float32."""
    B, T, I = x.shape
    H = params["w_hh"].shape[1]
    O = params["w4"].shape[0]
    G = 4 * H
    BP = max(8, _rup(B, 8))                 # pad batch to full f32 sublane tile
    L = max(_rup(G, 128), _rup(O, 128))     # lane-padded width (128 here)

    # --- batch padding + time-major flatten -------------------------------
    xpad = jnp.zeros((BP, T, I), jnp.float32).at[:B].set(x.astype(jnp.float32))
    x2d = jnp.transpose(xpad, (1, 0, 2)).reshape(T * BP, I)

    # --- gate permutation + tanh-via-sigmoid pre-scaling ------------------
    # PyTorch gate order [i, f, g, o] -> [i, f, o, g]; then scale the g
    # columns by 2 so tanh(g) = 2*sigmoid(2g) - 1 inside the kernel.
    perm = jnp.concatenate([jnp.arange(0, 2 * H),
                            jnp.arange(3 * H, 4 * H),
                            jnp.arange(2 * H, 3 * H)])
    gscale = jnp.concatenate([jnp.ones((3 * H,), jnp.float32),
                              jnp.full((H,), 2.0, jnp.float32)])
    wih_t = jnp.transpose(params["w_ih"]).astype(jnp.float32)[:, perm] * gscale
    whh_t = jnp.transpose(params["w_hh"]).astype(jnp.float32)[:, perm] * gscale
    b_lstm = ((params["b_ih"] + params["b_hh"]).astype(jnp.float32)[perm]
              * gscale).reshape(1, G)

    # --- fuse the activation-free fc1..fc4 chain into one affine map ------
    w1t = jnp.transpose(params["w1"]); w2t = jnp.transpose(params["w2"])
    w3t = jnp.transpose(params["w3"]); w4t = jnp.transpose(params["w4"])
    w_fc = (w1t @ w2t @ w3t @ w4t).astype(jnp.float32)                # (H, O)
    b_fc = (((params["b1"] @ w2t + params["b2"]) @ w3t + params["b3"]) @ w4t
            + params["b4"]).astype(jnp.float32).reshape(1, O)

    # --- pack all constant operands into one (rows, L) buffer -------------
    # Every segment starts on an 8-row boundary so kernel slices stay aligned.
    off_wih = 0
    off_whh = off_wih + _rup(I, 8)
    off_b = off_whh + _rup(H, 8)
    off_wfc = off_b + 8
    off_bfc = off_wfc + _rup(H, 8)
    n_rows = off_bfc + 8

    packed = jnp.zeros((n_rows, L), jnp.float32)
    packed = packed.at[off_wih:off_wih + I, :G].set(wih_t)
    packed = packed.at[off_whh:off_whh + H, :G].set(whh_t)
    packed = packed.at[off_b:off_b + 1, :G].set(b_lstm)
    packed = packed.at[off_wfc:off_wfc + H, :O].set(w_fc)
    packed = packed.at[off_bfc:off_bfc + 1, :O].set(b_fc)

    kernel = functools.partial(
        _lstm_netconf_kernel, T=T, BP=BP, I=I, H=H,
        off_wih=off_wih, off_whh=off_whh, off_b=off_b,
        off_wfc=off_wfc, off_bfc=off_bfc)

    vmem = pl.BlockSpec(memory_space=pltpu.MemorySpace.VMEM)
    out = pl.pallas_call(
        kernel,
        out_shape=jax.ShapeDtypeStruct((BP, L), jnp.float32),
        in_specs=[vmem, vmem],
        out_specs=vmem,
    )(x2d, packed)
    return out[:B, :O]


def _reference_forward(x, params):
    """Pure-JAX reference (faithful, un-fused PyTorch semantics)."""
    B, T, I = x.shape
    H = params["w_hh"].shape[1]
    h = jnp.zeros((B, H), jnp.float32)
    c = jnp.zeros((B, H), jnp.float32)
    bias = params["b_ih"] + params["b_hh"]
    for t in range(T):
        gates = x[:, t, :] @ params["w_ih"].T + h @ params["w_hh"].T + bias
        i_g = jax.nn.sigmoid(gates[:, 0 * H:1 * H])
        f_g = jax.nn.sigmoid(gates[:, 1 * H:2 * H])
        g_g = jnp.tanh(gates[:, 2 * H:3 * H])
        o_g = jax.nn.sigmoid(gates[:, 3 * H:4 * H])
        c = f_g * c + i_g * g_g
        h = o_g * jnp.tanh(c)
    out = h @ params["w1"].T + params["b1"]
    out = out @ params["w2"].T + params["b2"]
    out = out @ params["w3"].T + params["b3"]
    out = out @ params["w4"].T + params["b4"]
    return out


if __name__ == "__main__":
    # Small shapes consistent with the module:
    #   x: (batch=2, seq=8, input_size=16), hidden_size=32, output_size=2
    B, T, I, H, O = 2, 8, 16, 32, 2

    key = jax.random.PRNGKey(0)
    k_x, k_p = jax.random.split(key)
    x = jax.random.normal(k_x, (B, T, I), jnp.float32)
    params = init_params(k_p, I, H, O)

    out = lstm_netconf_forward(x, params)
    out = jax.block_until_ready(out)

    ref = _reference_forward(x, params)
    # Gate permutation, tanh-via-sigmoid rewrite, hoisted input projection and
    # fc-chain fusion are exact algebraic rewrites; tolerance only absorbs
    # small fp32 reassociation differences.
    np.testing.assert_allclose(np.asarray(out), np.asarray(ref),
                               rtol=1e-4, atol=5e-5)

    print("KERNEL_OK")
</pallas_src>

<mosaic_0001>
module attributes {stable_mosaic.version = 11 : i64} {
  func.func @_lstm_netconf_kernel(%arg0: memref<64x16xf32, #tpu.memory_space<vmem>>, %arg1: memref<96x128xf32, #tpu.memory_space<vmem>>, %arg2: memref<8x128xf32, #tpu.memory_space<vmem>>) attributes {dimension_semantics = [], scalar_prefetch = 0 : i64, scratch_operands = 0 : i64, tpu.core_type = #tpu.core_type<tc>} {
    %c0 = arith.constant 0 : index
    %c0_0 = arith.constant 0 : index
    %0 = vector.load %arg1[%c0, %c0_0] : memref<96x128xf32, #tpu.memory_space<vmem>>, vector<16x128xf32>
    %c16 = arith.constant 16 : index
    %c0_1 = arith.constant 0 : index
    %1 = vector.load %arg1[%c16, %c0_1] : memref<96x128xf32, #tpu.memory_space<vmem>>, vector<32x128xf32>
    %c48 = arith.constant 48 : index
    %c0_2 = arith.constant 0 : index
    %2 = vector.load %arg1[%c48, %c0_2] : memref<96x128xf32, #tpu.memory_space<vmem>>, vector<1x128xf32>
    %c56 = arith.constant 56 : index
    %c0_3 = arith.constant 0 : index
    %3 = vector.load %arg1[%c56, %c0_3] : memref<96x128xf32, #tpu.memory_space<vmem>>, vector<32x128xf32>
    %c88 = arith.constant 88 : index
    %c0_4 = arith.constant 0 : index
    %4 = vector.load %arg1[%c88, %c0_4] : memref<96x128xf32, #tpu.memory_space<vmem>>, vector<1x128xf32>
    %c0_5 = arith.constant 0 : index
    %c0_6 = arith.constant 0 : index
    %5 = vector.load %arg0[%c0_5, %c0_6] : memref<64x16xf32, #tpu.memory_space<vmem>>, vector<64x16xf32>
    %cst = arith.constant dense<0.000000e+00> : vector<64x128xf32>
    %6 = tpu.matmul %5, %0, %cst {dimension_numbers = #tpu.dot_dimension_numbers<[1], [0], [0], [1], [0, 0, 1, 1], [], []>} : vector<64x16xf32>, vector<16x128xf32>, vector<64x128xf32> -> vector<64x128xf32>
    %7 = vector.broadcast %2 : vector<1x128xf32> to vector<64x128xf32>
    %8 = arith.addf %6, %7 : vector<64x128xf32>
    %cst_7 = arith.constant 0.000000e+00 : f32
    %9 = vector.broadcast %cst_7 : f32 to vector<8x32xf32>
    %cst_8 = arith.constant 0.000000e+00 : f32
    %10 = vector.broadcast %cst_8 : f32 to vector<8x32xf32>
    %11 = vector.extract_strided_slice %8 {offsets = [0, 0], sizes = [8, 128], strides = [1, 1]} : vector<64x128xf32> to vector<8x128xf32>
    %cst_9 = arith.constant dense<0.000000e+00> : vector<8x128xf32>
    %12 = tpu.matmul %9, %1, %cst_9 {dimension_numbers = #tpu.dot_dimension_numbers<[1], [0], [0], [1], [0, 0, 1, 1], [], []>} : vector<8x32xf32>, vector<32x128xf32>, vector<8x128xf32> -> vector<8x128xf32>
    %13 = arith.addf %11, %12 : vector<8x128xf32>
    %14 = arith.negf %13 : vector<8x128xf32>
    %15 = math.exp %14 : vector<8x128xf32>
    %cst_10 = arith.constant 1.000000e+00 : f32
    %16 = vector.broadcast %cst_10 : f32 to vector<8x128xf32>
    %17 = arith.addf %16, %15 : vector<8x128xf32>
    %18 = arith.divf %16, %17 : vector<8x128xf32>
    %19 = vector.extract_strided_slice %18 {offsets = [0, 0], sizes = [8, 32], strides = [1, 1]} : vector<8x128xf32> to vector<8x32xf32>
    %20 = vector.extract_strided_slice %18 {offsets = [0, 32], sizes = [8, 32], strides = [1, 1]} : vector<8x128xf32> to vector<8x32xf32>
    %21 = vector.extract_strided_slice %18 {offsets = [0, 64], sizes = [8, 32], strides = [1, 1]} : vector<8x128xf32> to vector<8x32xf32>
    %22 = vector.extract_strided_slice %18 {offsets = [0, 96], sizes = [8, 32], strides = [1, 1]} : vector<8x128xf32> to vector<8x32xf32>
    %cst_11 = arith.constant 2.000000e+00 : f32
    %23 = vector.broadcast %cst_11 : f32 to vector<8x32xf32>
    %24 = arith.mulf %23, %22 : vector<8x32xf32>
    %cst_12 = arith.constant 1.000000e+00 : f32
    %25 = vector.broadcast %cst_12 : f32 to vector<8x32xf32>
    %26 = arith.subf %24, %25 : vector<8x32xf32>
    %27 = arith.mulf %20, %10 : vector<8x32xf32>
    %28 = arith.mulf %19, %26 : vector<8x32xf32>
    %29 = arith.addf %27, %28 : vector<8x32xf32>
    %30 = math.tanh %29 : vector<8x32xf32>
    %31 = arith.mulf %21, %30 : vector<8x32xf32>
    %32 = vector.extract_strided_slice %8 {offsets = [8, 0], sizes = [8, 128], strides = [1, 1]} : vector<64x128xf32> to vector<8x128xf32>
    %cst_13 = arith.constant dense<0.000000e+00> : vector<8x128xf32>
    %33 = tpu.matmul %31, %1, %cst_13 {dimension_numbers = #tpu.dot_dimension_numbers<[1], [0], [0], [1], [0, 0, 1, 1], [], []>} : vector<8x32xf32>, vector<32x128xf32>, vector<8x128xf32> -> vector<8x128xf32>
    %34 = arith.addf %32, %33 : vector<8x128xf32>
    %35 = arith.negf %34 : vector<8x128xf32>
    %36 = math.exp %35 : vector<8x128xf32>
    %cst_14 = arith.constant 1.000000e+00 : f32
    %37 = vector.broadcast %cst_14 : f32 to vector<8x128xf32>
    %38 = arith.addf %37, %36 : vector<8x128xf32>
    %39 = arith.divf %37, %38 : vector<8x128xf32>
    %40 = vector.extract_strided_slice %39 {offsets = [0, 0], sizes = [8, 32], strides = [1, 1]} : vector<8x128xf32> to vector<8x32xf32>
    %41 = vector.extract_strided_slice %39 {offsets = [0, 32], sizes = [8, 32], strides = [1, 1]} : vector<8x128xf32> to vector<8x32xf32>
    %42 = vector.extract_strided_slice %39 {offsets = [0, 64], sizes = [8, 32], strides = [1, 1]} : vector<8x128xf32> to vector<8x32xf32>
    %43 = vector.extract_strided_slice %39 {offsets = [0, 96], sizes = [8, 32], strides = [1, 1]} : vector<8x128xf32> to vector<8x32xf32>
    %cst_15 = arith.constant 2.000000e+00 : f32
    %44 = vector.broadcast %cst_15 : f32 to vector<8x32xf32>
    %45 = arith.mulf %44, %43 : vector<8x32xf32>
    %cst_16 = arith.constant 1.000000e+00 : f32
    %46 = vector.broadcast %cst_16 : f32 to vector<8x32xf32>
    %47 = arith.subf %45, %46 : vector<8x32xf32>
    %48 = arith.mulf %41, %29 : vector<8x32xf32>
    %49 = arith.mulf %40, %47 : vector<8x32xf32>
    %50 = arith.addf %48, %49 : vector<8x32xf32>
    %51 = math.tanh %50 : vector<8x32xf32>
    %52 = arith.mulf %42, %51 : vector<8x32xf32>
    %53 = vector.extract_strided_slice %8 {offsets = [16, 0], sizes = [8, 128], strides = [1, 1]} : vector<64x128xf32> to vector<8x128xf32>
    %cst_17 = arith.constant dense<0.000000e+00> : vector<8x128xf32>
    %54 = tpu.matmul %52, %1, %cst_17 {dimension_numbers = #tpu.dot_dimension_numbers<[1], [0], [0], [1], [0, 0, 1, 1], [], []>} : vector<8x32xf32>, vector<32x128xf32>, vector<8x128xf32> -> vector<8x128xf32>
    %55 = arith.addf %53, %54 : vector<8x128xf32>
    %56 = arith.negf %55 : vector<8x128xf32>
    %57 = math.exp %56 : vector<8x128xf32>
    %cst_18 = arith.constant 1.000000e+00 : f32
    %58 = vector.broadcast %cst_18 : f32 to vector<8x128xf32>
    %59 = arith.addf %58, %57 : vector<8x128xf32>
    %60 = arith.divf %58, %59 : vector<8x128xf32>
    %61 = vector.extract_strided_slice %60 {offsets = [0, 0], sizes = [8, 32], strides = [1, 1]} : vector<8x128xf32> to vector<8x32xf32>
    %62 = vector.extract_strided_slice %60 {offsets = [0, 32], sizes = [8, 32], strides = [1, 1]} : vector<8x128xf32> to vector<8x32xf32>
    %63 = vector.extract_strided_slice %60 {offsets = [0, 64], sizes = [8, 32], strides = [1, 1]} : vector<8x128xf32> to vector<8x32xf32>
    %64 = vector.extract_strided_slice %60 {offsets = [0, 96], sizes = [8, 32], strides = [1, 1]} : vector<8x128xf32> to vector<8x32xf32>
    %cst_19 = arith.constant 2.000000e+00 : f32
    %65 = vector.broadcast %cst_19 : f32 to vector<8x32xf32>
    %66 = arith.mulf %65, %64 : vector<8x32xf32>
    %cst_20 = arith.constant 1.000000e+00 : f32
    %67 = vector.broadcast %cst_20 : f32 to vector<8x32xf32>
    %68 = arith.subf %66, %67 : vector<8x32xf32>
    %69 = arith.mulf %62, %50 : vector<8x32xf32>
    %70 = arith.mulf %61, %68 : vector<8x32xf32>
    %71 = arith.addf %69, %70 : vector<8x32xf32>
    %72 = math.tanh %71 : vector<8x32xf32>
    %73 = arith.mulf %63, %72 : vector<8x32xf32>
    %74 = vector.extract_strided_slice %8 {offsets = [24, 0], sizes = [8, 128], strides = [1, 1]} : vector<64x128xf32> to vector<8x128xf32>
    %cst_21 = arith.constant dense<0.000000e+00> : vector<8x128xf32>
    %75 = tpu.matmul %73, %1, %cst_21 {dimension_numbers = #tpu.dot_dimension_numbers<[1], [0], [0], [1], [0, 0, 1, 1], [], []>} : vector<8x32xf32>, vector<32x128xf32>, vector<8x128xf32> -> vector<8x128xf32>
    %76 = arith.addf %74, %75 : vector<8x128xf32>
    %77 = arith.negf %76 : vector<8x128xf32>
    %78 = math.exp %77 : vector<8x128xf32>
    %cst_22 = arith.constant 1.000000e+00 : f32
    %79 = vector.broadcast %cst_22 : f32 to vector<8x128xf32>
    %80 = arith.addf %79, %78 : vector<8x128xf32>
    %81 = arith.divf %79, %80 : vector<8x128xf32>
    %82 = vector.extract_strided_slice %81 {offsets = [0, 0], sizes = [8, 32], strides = [1, 1]} : vector<8x128xf32> to vector<8x32xf32>
    %83 = vector.extract_strided_slice %81 {offsets = [0, 32], sizes = [8, 32], strides = [1, 1]} : vector<8x128xf32> to vector<8x32xf32>
    %84 = vector.extract_strided_slice %81 {offsets = [0, 64], sizes = [8, 32], strides = [1, 1]} : vector<8x128xf32> to vector<8x32xf32>
    %85 = vector.extract_strided_slice %81 {offsets = [0, 96], sizes = [8, 32], strides = [1, 1]} : vector<8x128xf32> to vector<8x32xf32>
    %cst_23 = arith.constant 2.000000e+00 : f32
    %86 = vector.broadcast %cst_23 : f32 to vector<8x32xf32>
    %87 = arith.mulf %86, %85 : vector<8x32xf32>
    %cst_24 = arith.constant 1.000000e+00 : f32
    %88 = vector.broadcast %cst_24 : f32 to vector<8x32xf32>
    %89 = arith.subf %87, %88 : vector<8x32xf32>
    %90 = arith.mulf %83, %71 : vector<8x32xf32>
    %91 = arith.mulf %82, %89 : vector<8x32xf32>
    %92 = arith.addf %90, %91 : vector<8x32xf32>
    %93 = math.tanh %92 : vector<8x32xf32>
    %94 = arith.mulf %84, %93 : vector<8x32xf32>
    %95 = vector.extract_strided_slice %8 {offsets = [32, 0], sizes = [8, 128], strides = [1, 1]} : vector<64x128xf32> to vector<8x128xf32>
    %cst_25 = arith.constant dense<0.000000e+00> : vector<8x128xf32>
    %96 = tpu.matmul %94, %1, %cst_25 {dimension_numbers = #tpu.dot_dimension_numbers<[1], [0], [0], [1], [0, 0, 1, 1], [], []>} : vector<8x32xf32>, vector<32x128xf32>, vector<8x128xf32> -> vector<8x128xf32>
    %97 = arith.addf %95, %96 : vector<8x128xf32>
    %98 = arith.negf %97 : vector<8x128xf32>
    %99 = math.exp %98 : vector<8x128xf32>
    %cst_26 = arith.constant 1.000000e+00 : f32
    %100 = vector.broadcast %cst_26 : f32 to vector<8x128xf32>
    %101 = arith.addf %100, %99 : vector<8x128xf32>
    %102 = arith.divf %100, %101 : vector<8x128xf32>
    %103 = vector.extract_strided_slice %102 {offsets = [0, 0], sizes = [8, 32], strides = [1, 1]} : vector<8x128xf32> to vector<8x32xf32>
    %104 = vector.extract_strided_slice %102 {offsets = [0, 32], sizes = [8, 32], strides = [1, 1]} : vector<8x128xf32> to vector<8x32xf32>
    %105 = vector.extract_strided_slice %102 {offsets = [0, 64], sizes = [8, 32], strides = [1, 1]} : vector<8x128xf32> to vector<8x32xf32>
    %106 = vector.extract_strided_slice %102 {offsets = [0, 96], sizes = [8, 32], strides = [1, 1]} : vector<8x128xf32> to vector<8x32xf32>
    %cst_27 = arith.constant 2.000000e+00 : f32
    %107 = vector.broadcast %cst_27 : f32 to vector<8x32xf32>
    %108 = arith.mulf %107, %106 : vector<8x32xf32>
    %cst_28 = arith.constant 1.000000e+00 : f32
    %109 = vector.broadcast %cst_28 : f32 to vector<8x32xf32>
    %110 = arith.subf %108, %109 : vector<8x32xf32>
    %111 = arith.mulf %104, %92 : vector<8x32xf32>
    %112 = arith.mulf %103, %110 : vector<8x32xf32>
    %113 = arith.addf %111, %112 : vector<8x32xf32>
    %114 = math.tanh %113 : vector<8x32xf32>
    %115 = arith.mulf %105, %114 : vector<8x32xf32>
    %116 = vector.extract_strided_slice %8 {offsets = [40, 0], sizes = [8, 128], strides = [1, 1]} : vector<64x128xf32> to vector<8x128xf32>
    %cst_29 = arith.constant dense<0.000000e+00> : vector<8x128xf32>
    %117 = tpu.matmul %115, %1, %cst_29 {dimension_numbers = #tpu.dot_dimension_numbers<[1], [0], [0], [1], [0, 0, 1, 1], [], []>} : vector<8x32xf32>, vector<32x128xf32>, vector<8x128xf32> -> vector<8x128xf32>
    %118 = arith.addf %116, %117 : vector<8x128xf32>
    %119 = arith.negf %118 : vector<8x128xf32>
    %120 = math.exp %119 : vector<8x128xf32>
    %cst_30 = arith.constant 1.000000e+00 : f32
    %121 = vector.broadcast %cst_30 : f32 to vector<8x128xf32>
    %122 = arith.addf %121, %120 : vector<8x128xf32>
    %123 = arith.divf %121, %122 : vector<8x128xf32>
    %124 = vector.extract_strided_slice %123 {offsets = [0, 0], sizes = [8, 32], strides = [1, 1]} : vector<8x128xf32> to vector<8x32xf32>
    %125 = vector.extract_strided_slice %123 {offsets = [0, 32], sizes = [8, 32], strides = [1, 1]} : vector<8x128xf32> to vector<8x32xf32>
    %126 = vector.extract_strided_slice %123 {offsets = [0, 64], sizes = [8, 32], strides = [1, 1]} : vector<8x128xf32> to vector<8x32xf32>
    %127 = vector.extract_strided_slice %123 {offsets = [0, 96], sizes = [8, 32], strides = [1, 1]} : vector<8x128xf32> to vector<8x32xf32>
    %cst_31 = arith.constant 2.000000e+00 : f32
    %128 = vector.broadcast %cst_31 : f32 to vector<8x32xf32>
    %129 = arith.mulf %128, %127 : vector<8x32xf32>
    %cst_32 = arith.constant 1.000000e+00 : f32
    %130 = vector.broadcast %cst_32 : f32 to vector<8x32xf32>
    %131 = arith.subf %129, %130 : vector<8x32xf32>
    %132 = arith.mulf %125, %113 : vector<8x32xf32>
    %133 = arith.mulf %124, %131 : vector<8x32xf32>
    %134 = arith.addf %132, %133 : vector<8x32xf32>
    %135 = math.tanh %134 : vector<8x32xf32>
    %136 = arith.mulf %126, %135 : vector<8x32xf32>
    %137 = vector.extract_strided_slice %8 {offsets = [48, 0], sizes = [8, 128], strides = [1, 1]} : vector<64x128xf32> to vector<8x128xf32>
    %cst_33 = arith.constant dense<0.000000e+00> : vector<8x128xf32>
    %138 = tpu.matmul %136, %1, %cst_33 {dimension_numbers = #tpu.dot_dimension_numbers<[1], [0], [0], [1], [0, 0, 1, 1], [], []>} : vector<8x32xf32>, vector<32x128xf32>, vector<8x128xf32> -> vector<8x128xf32>
    %139 = arith.addf %137, %138 : vector<8x128xf32>
    %140 = arith.negf %139 : vector<8x128xf32>
    %141 = math.exp %140 : vector<8x128xf32>
    %cst_34 = arith.constant 1.000000e+00 : f32
    %142 = vector.broadcast %cst_34 : f32 to vector<8x128xf32>
    %143 = arith.addf %142, %141 : vector<8x128xf32>
    %144 = arith.divf %142, %143 : vector<8x128xf32>
    %145 = vector.extract_strided_slice %144 {offsets = [0, 0], sizes = [8, 32], strides = [1, 1]} : vector<8x128xf32> to vector<8x32xf32>
    %146 = vector.extract_strided_slice %144 {offsets = [0, 32], sizes = [8, 32], strides = [1, 1]} : vector<8x128xf32> to vector<8x32xf32>
    %147 = vector.extract_strided_slice %144 {offsets = [0, 64], sizes = [8, 32], strides = [1, 1]} : vector<8x128xf32> to vector<8x32xf32>
    %148 = vector.extract_strided_slice %144 {offsets = [0, 96], sizes = [8, 32], strides = [1, 1]} : vector<8x128xf32> to vector<8x32xf32>
    %cst_35 = arith.constant 2.000000e+00 : f32
    %149 = vector.broadcast %cst_35 : f32 to vector<8x32xf32>
    %150 = arith.mulf %149, %148 : vector<8x32xf32>
    %cst_36 = arith.constant 1.000000e+00 : f32
    %151 = vector.broadcast %cst_36 : f32 to vector<8x32xf32>
    %152 = arith.subf %150, %151 : vector<8x32xf32>
    %153 = arith.mulf %146, %134 : vector<8x32xf32>
    %154 = arith.mulf %145, %152 : vector<8x32xf32>
    %155 = arith.addf %153, %154 : vector<8x32xf32>
    %156 = math.tanh %155 : vector<8x32xf32>
    %157 = arith.mulf %147, %156 : vector<8x32xf32>
    %158 = vector.extract_strided_slice %8 {offsets = [56, 0], sizes = [8, 128], strides = [1, 1]} : vector<64x128xf32> to vector<8x128xf32>
    %cst_37 = arith.constant dense<0.000000e+00> : vector<8x128xf32>
    %159 = tpu.matmul %157, %1, %cst_37 {dimension_numbers = #tpu.dot_dimension_numbers<[1], [0], [0], [1], [0, 0, 1, 1], [], []>} : vector<8x32xf32>, vector<32x128xf32>, vector<8x128xf32> -> vector<8x128xf32>
    %160 = arith.addf %158, %159 : vector<8x128xf32>
    %161 = arith.negf %160 : vector<8x128xf32>
    %162 = math.exp %161 : vector<8x128xf32>
    %cst_38 = arith.constant 1.000000e+00 : f32
    %163 = vector.broadcast %cst_38 : f32 to vector<8x128xf32>
    %164 = arith.addf %163, %162 : vector<8x128xf32>
    %165 = arith.divf %163, %164 : vector<8x128xf32>
    %166 = vector.extract_strided_slice %165 {offsets = [0, 0], sizes = [8, 32], strides = [1, 1]} : vector<8x128xf32> to vector<8x32xf32>
    %167 = vector.extract_strided_slice %165 {offsets = [0, 32], sizes = [8, 32], strides = [1, 1]} : vector<8x128xf32> to vector<8x32xf32>
    %168 = vector.extract_strided_slice %165 {offsets = [0, 64], sizes = [8, 32], strides = [1, 1]} : vector<8x128xf32> to vector<8x32xf32>
    %169 = vector.extract_strided_slice %165 {offsets = [0, 96], sizes = [8, 32], strides = [1, 1]} : vector<8x128xf32> to vector<8x32xf32>
    %cst_39 = arith.constant 2.000000e+00 : f32
    %170 = vector.broadcast %cst_39 : f32 to vector<8x32xf32>
    %171 = arith.mulf %170, %169 : vector<8x32xf32>
    %cst_40 = arith.constant 1.000000e+00 : f32
    %172 = vector.broadcast %cst_40 : f32 to vector<8x32xf32>
    %173 = arith.subf %171, %172 : vector<8x32xf32>
    %174 = arith.mulf %167, %155 : vector<8x32xf32>
    %175 = arith.mulf %166, %173 : vector<8x32xf32>
    %176 = arith.addf %174, %175 : vector<8x32xf32>
    %177 = math.tanh %176 : vector<8x32xf32>
    %178 = arith.mulf %168, %177 : vector<8x32xf32>
    %cst_41 = arith.constant dense<0.000000e+00> : vector<8x128xf32>
    %179 = tpu.matmul %178, %3, %cst_41 {dimension_numbers = #tpu.dot_dimension_numbers<[1], [0], [0], [1], [0, 0, 1, 1], [], []>} : vector<8x32xf32>, vector<32x128xf32>, vector<8x128xf32> -> vector<8x128xf32>
    %180 = vector.broadcast %4 : vector<1x128xf32> to vector<8x128xf32>
    %181 = arith.addf %179, %180 : vector<8x128xf32>
    %c0_42 = arith.constant 0 : index
    %c0_43 = arith.constant 0 : index
    %182 = vector.load %arg2[%c0_42, %c0_43] : memref<8x128xf32, #tpu.memory_space<vmem>>, vector<8x128xf32>
    tpu.vector_store %arg2[%c0_42, %c0_43], %181 {strides = array<i32>} : memref<8x128xf32, #tpu.memory_space<vmem>>, vector<8x128xf32>,
    return
  }
}

</mosaic_0001>

<llo_original>
// kernel: tpu_custom_call.1
$region0: #{tpu_custom_call.1}
  #allocation0 [shape = 'u32[]', space=smem, size = 0x4, offset = 0x4, fixed_abs, tag = 'smem constant byte address 0x4 - core index']
  #allocation1 [shape = 'u32[144,128]{1,0:T(1,128)}', space=vmem, size = 0x12000, scoped, tag = 'internal scratch']
  %s0 = inlined_call_operand.vmem [shape: f32[64,16], index: 0, kind: input, shape index: {}]
  %s1 = inlined_call_operand.hbm [shape: f32[96,128], index: 1, kind: input, shape index: {}]
  %s2 = inlined_call_operand.hbm [shape: f32[8,128], index: 2, kind: output, shape index: {}]
  %s3 = sld [smem:[#allocation0]]
  $region22: #{tpu_custom_call.1} parent=0
    _
  %s5 = ssub.s32 1, %s3
  %s6 = scalar_select 0, %s5, %s3
  $region1: #{tpu_custom_call.1} parent=0
    #allocation2 [shape = 'u8[49152]{0}', space=vmem, size = 0xc000, scoped, tag = 'input window, operand 1, single buffered']
    #allocation3 [shape = 's32[1]{0}', space=sflag, size = 0x4, scoped, tag = 'scoped memory for tpu_custom_call.1']
    #allocation4 [shape = 's32[1]{0}', space=sflag, size = 0x4, scoped, tag = 'scoped memory for tpu_custom_call.1']
    #allocation5 [shape = 'u8[4096]{0}', space=vmem, size = 0x1000, scoped, tag = 'output window, operand 0, single buffered']
    %7 = vsyncpa [#allocation3], 0
    %8 = vsyncpa [#allocation4], 0
    // Predicated region
    $region2: #{tpu_custom_call.1} parent=1 // pred_check
      _
    $region3: #{tpu_custom_call.1} parent=1 // pred_check_branch
      %10 = sbr.rel (0) target = $region5
    $region4: #{tpu_custom_call.1} parent=1 // pred_region
      _
    $region5: #{tpu_custom_call.1} parent=1 // pred_fallthru
      _
    // Predicated region
    $region6: #{tpu_custom_call.1} parent=1 // pred_check
      _
    $region7: #{tpu_custom_call.1} parent=1 // pred_check_branch
      %12 = sbr.rel (0) target = $region9
    $region8: #{tpu_custom_call.1} parent=1 // pred_region
      %s14 = ssub.s32 1536, 1536
      %15 = vsyncadd [#allocation3], %s14
      %s16 = sshll.u32 [#allocation2], 4
      %s17 = int_to_ptr.vmem [resolvable:$true] %s16
      %22 = dma.hbm_to_vmem [thread:$0]  %s1, 1536, %s17, [#allocation3], 128, 128, 8
    $region9: #{tpu_custom_call.1} parent=1 // pred_fallthru
      _
    // Predicated region
    $region10: #{tpu_custom_call.1} parent=1 // pred_check
      _
    $region11: #{tpu_custom_call.1} parent=1 // pred_check_branch
      %24 = sbr.rel (0) target = $region13
    $region12: #{tpu_custom_call.1} parent=1 // pred_region
      %25 = dma.done [#allocation3], 1536
    $region13: #{tpu_custom_call.1} parent=1 // pred_fallthru
      _
    %v26 = vld [vmem:[#allocation2] sm:$0xff]
    %v27 = vld [vmem:[#allocation2 + $0x8] sm:$0xff]
    %v28 = vld [vmem:[#allocation2 + $0x10] sm:$0xff]
    %v29 = vld [vmem:[#allocation2 + $0x18] sm:$0xff]
    %v30 = vld [vmem:[#allocation2 + $0x20] sm:$0xff]
    %v31 = vld [vmem:[#allocation2 + $0x28] sm:$0xff]
    %v32 = vld [vmem:[#allocation2 + $0x30] sm:$0x1]
    %v33 = vld [vmem:[#allocation2 + $0x38] sm:$0xff]
    %v34 = vld [vmem:[#allocation2 + $0x40] sm:$0xff]
    %v35 = vld [vmem:[#allocation2 + $0x48] sm:$0xff]
    %v36 = vld [vmem:[#allocation2 + $0x50] sm:$0xff]
    %v37 = vld [vmem:[#allocation2 + $0x58] sm:$0x1]
    %v38 = vld [vmem:[%s0] sm:$0xff]
    %v39 = vld [vmem:[%s0 + $0x8] sm:$0xff]
    %v40 = vld [vmem:[%s0 + $0x10] sm:$0xff]
    %v41 = vld [vmem:[%s0 + $0x18] sm:$0xff]
    %v42 = vld [vmem:[%s0 + $0x20] sm:$0xff]
    %v43 = vld [vmem:[%s0 + $0x28] sm:$0xff]
    %v44 = vld [vmem:[%s0 + $0x30] sm:$0xff]
    %v45 = vld [vmem:[%s0 + $0x38] sm:$0xff]
    %v46 = vlaneseq
    %v47 = vshrl.u32 %v46, 7
    %v48 = vsub.s32 0, %v47
    %v49 = vrot.slane %v32, %v48
    %vm50 = vcmask 130048
    %v52 = vsel %vm50, %v38, 0
    %v55 = vsel %vm50, %v39, 0
    %v58 = vsel %vm50, %v40, 0
    %v61 = vsel %vm50, %v41, 0
    %v64 = vsel %vm50, %v42, 0
    %v67 = vsel %vm50, %v43, 0
    %v70 = vsel %vm50, %v44, 0
    %v73 = vsel %vm50, %v45, 0
    %75 = vmatprep.subr.mxu0 0.0
    %76 = vmatpush1.msra.mxu0 %v26
    %77 = vmatprep.subr.mxu0 0.0
    %78 = vmatpush1.msra.mxu0 %v27
    %79 = vmatprep.subr.mxu0 0.0
    %80 = vmatpush1.msra.mxu0 0.0
    %81 = vmatprep.subr.mxu0 0.0
    %82 = vmatpush1.msra.mxu0 0.0
    %83 = vmatprep.subr.mxu0 0.0
    %84 = vmatpush1.msra.mxu0 0.0
    %85 = vmatprep.subr.mxu0 0.0
    %86 = vmatpush1.msra.mxu0 0.0
    %87 = vmatprep.subr.mxu0 0.0
    %88 = vmatpush1.msra.mxu0 0.0
    %89 = vmatprep.subr.mxu0 0.0
    %90 = vmatpush1.msra.mxu0 0.0
    %91 = vmatprep.subr.mxu0 0.0
    %92 = vmatpush1.msra.mxu0 0.0
    %93 = vmatprep.subr.mxu0 0.0
    %94 = vmatpush1.msra.mxu0 0.0
    %95 = vmatprep.subr.mxu0 0.0
    %96 = vmatpush1.msra.mxu0 0.0
    %97 = vmatprep.subr.mxu0 0.0
    %98 = vmatpush1.msra.mxu0 0.0
    %99 = vmatprep.subr.mxu0 0.0
    %100 = vmatpush1.msra.mxu0 0.0
    %101 = vmatprep.subr.mxu0 0.0
    %102 = vmatpush1.msra.mxu0 0.0
    %103 = vmatprep.subr.mxu0 0.0
    %104 = vmatpush1.msra.mxu0 0.0
    %105 = vmatprep.subr.mxu0 0.0
    %106 = vmatpush1.msra.mxu0 0.0
    %107 = vmatprep.subr.mxu0 0.0
    %108 = vmatpush1.msra.mxu0 0.0
    %109 = vmatprep.subr.mxu0 0.0
    %110 = vmatpush1.msra.mxu0 0.0
    %111 = vmatprep.subr.mxu0 0.0
    %112 = vmatpush1.msra.mxu0 0.0
    %113 = vmatprep.subr.mxu0 0.0
    %114 = vmatpush1.msra.mxu0 0.0
    %115 = vmatprep.subr.mxu0 0.0
    %116 = vmatpush1.msra.mxu0 0.0
    %117 = vmatprep.subr.mxu0 0.0
    %118 = vmatpush1.msra.mxu0 0.0
    %119 = vmatprep.subr.mxu0 0.0
    %120 = vmatpush1.msra.mxu0 0.0
    %121 = vmatprep.subr.mxu0 0.0
    %122 = vmatpush1.msra.mxu0 0.0
    %123 = vmatprep.subr.mxu0 0.0
    %124 = vmatpush1.msra.mxu0 0.0
    %125 = vmatprep.subr.mxu0 0.0
    %126 = vmatpush1.msra.mxu0 0.0
    %127 = vmatprep.subr.mxu0 0.0
    %128 = vmatpush1.msra.mxu0 0.0
    %129 = vmatprep.subr.mxu0 0.0
    %130 = vmatpush1.msra.mxu0 0.0
    %131 = vmatprep.subr.mxu0 0.0
    %132 = vmatpush1.msra.mxu0 0.0
    %133 = vmatprep.subr.mxu0 0.0
    %134 = vmatpush1.msra.mxu0 0.0
    %135 = vmatprep.subr.mxu0 0.0
    %136 = vmatpush1.msra.mxu0 0.0
    %137 = vmatprep.subr.mxu0 0.0
    %138 = vmatpush1.msra.mxu0 0.0
    %139 = vmatprep.mubr.f32.mxu0 0.0
    %140 = vmatmul.mubr.f32.gmra.mrb[0].mxu0 %v52
    %v141 = vpop.f32.mrb[0].mxu0
    %v142 = vadd.f32 %v49, %v141
    %v143 = vpop.f32.mrb[0].mxu0
    %144 = vmatprep.mubr.f32.mxu0 0.0
    %145 = vmatmul.mubr.f32.gmra.mrb[0].mxu0 %v55
    %v146 = vpop.f32.mrb[0].mxu0
    %v147 = vadd.f32 %v49, %v146
    %v148 = vpop.f32.mrb[0].mxu0
    %149 = vmatprep.mubr.f32.mxu0 0.0
    %150 = vmatmul.mubr.f32.gmra.mrb[0].mxu0 %v58
    %v151 = vpop.f32.mrb[0].mxu0
    %v152 = vadd.f32 %v49, %v151
    %v153 = vpop.f32.mrb[0].mxu0
    %154 = vmatprep.mubr.f32.mxu0 0.0
    %155 = vmatmul.mubr.f32.gmra.mrb[0].mxu0 %v61
    %v156 = vpop.f32.mrb[0].mxu0
    %v157 = vadd.f32 %v49, %v156
    %v158 = vpop.f32.mrb[0].mxu0
    %159 = vmatprep.mubr.f32.mxu0 0.0
    %160 = vmatmul.mubr.f32.gmra.mrb[0].mxu0 %v64
    %v161 = vpop.f32.mrb[0].mxu0
    %v162 = vadd.f32 %v49, %v161
    %v163 = vpop.f32.mrb[0].mxu0
    %164 = vmatprep.mubr.f32.mxu0 0.0
    %165 = vmatmul.mubr.f32.gmra.mrb[0].mxu0 %v67
    %v166 = vpop.f32.mrb[0].mxu0
    %v167 = vadd.f32 %v49, %v166
    %v168 = vpop.f32.mrb[0].mxu0
    %169 = vmatprep.mubr.f32.mxu0 0.0
    %170 = vmatmul.mubr.f32.gmra.mrb[0].mxu0 %v70
    %v171 = vpop.f32.mrb[0].mxu0
    %v172 = vadd.f32 %v49, %v171
    %v173 = vpop.f32.mrb[0].mxu0
    %174 = vmatprep.mubr.f32.mxu0 0.0
    %175 = vmatmul.mubr.f32.gmra.mrb[0].mxu0 %v73
    %v176 = vpop.f32.mrb[0].mxu0
    %v177 = vadd.f32 %v49, %v176
    %v178 = vpop.f32.mrb[0].mxu0
    %179 = vdwg.mxu0
    %vm180 = vcmask 261120
    %v182 = vsel %vm180, 0.0, 0
    %184 = vmatprep.subr.mxu0 0.0
    %185 = vmatpush1.msra.mxu0 %v28
    %186 = vmatprep.subr.mxu0 0.0
    %187 = vmatpush1.msra.mxu0 %v29
    %188 = vmatprep.subr.mxu0 0.0
    %189 = vmatpush1.msra.mxu0 %v30
    %190 = vmatprep.subr.mxu0 0.0
    %191 = vmatpush1.msra.mxu0 %v31
    %192 = vmatprep.subr.mxu0 0.0
    %193 = vmatpush1.msra.mxu0 0.0
    %194 = vmatprep.subr.mxu0 0.0
    %195 = vmatpush1.msra.mxu0 0.0
    %196 = vmatprep.subr.mxu0 0.0
    %197 = vmatpush1.msra.mxu0 0.0
    %198 = vmatprep.subr.mxu0 0.0
    %199 = vmatpush1.msra.mxu0 0.0
    %200 = vmatprep.subr.mxu0 0.0
    %201 = vmatpush1.msra.mxu0 0.0
    %202 = vmatprep.subr.mxu0 0.0
    %203 = vmatpush1.msra.mxu0 0.0
    %204 = vmatprep.subr.mxu0 0.0
    %205 = vmatpush1.msra.mxu0 0.0
    %206 = vmatprep.subr.mxu0 0.0
    %207 = vmatpush1.msra.mxu0 0.0
    %208 = vmatprep.subr.mxu0 0.0
    %209 = vmatpush1.msra.mxu0 0.0
    %210 = vmatprep.subr.mxu0 0.0
    %211 = vmatpush1.msra.mxu0 0.0
    %212 = vmatprep.subr.mxu0 0.0
    %213 = vmatpush1.msra.mxu0 0.0
    %214 = vmatprep.subr.mxu0 0.0
    %215 = vmatpush1.msra.mxu0 0.0
    %216 = vmatprep.subr.mxu0 0.0
    %217 = vmatpush1.msra.mxu0 0.0
    %218 = vmatprep.subr.mxu0 0.0
    %219 = vmatpush1.msra.mxu0 0.0
    %220 = vmatprep.subr.mxu0 0.0
    %221 = vmatpush1.msra.mxu0 0.0
    %222 = vmatprep.subr.mxu0 0.0
    %223 = vmatpush1.msra.mxu0 0.0
    %224 = vmatprep.subr.mxu0 0.0
    %225 = vmatpush1.msra.mxu0 0.0
    %226 = vmatprep.subr.mxu0 0.0
    %227 = vmatpush1.msra.mxu0 0.0
    %228 = vmatprep.subr.mxu0 0.0
    %229 = vmatpush1.msra.mxu0 0.0
    %230 = vmatprep.subr.mxu0 0.0
    %231 = vmatpush1.msra.mxu0 0.0
    %232 = vmatprep.subr.mxu0 0.0
    %233 = vmatpush1.msra.mxu0 0.0
    %234 = vmatprep.subr.mxu0 0.0
    %235 = vmatpush1.msra.mxu0 0.0
    %236 = vmatprep.subr.mxu0 0.0
    %237 = vmatpush1.msra.mxu0 0.0
    %238 = vmatprep.subr.mxu0 0.0
    %239 = vmatpush1.msra.mxu0 0.0
    %240 = vmatprep.subr.mxu0 0.0
    %241 = vmatpush1.msra.mxu0 0.0
    %242 = vmatprep.subr.mxu0 0.0
    %243 = vmatpush1.msra.mxu0 0.0
    %244 = vmatprep.subr.mxu0 0.0
    %245 = vmatpush1.msra.mxu0 0.0
    %246 = vmatprep.subr.mxu0 0.0
    %247 = vmatpush1.msra.mxu0 0.0
    %248 = vmatprep.mubr.f32.mxu0 0.0
    %249 = vmatmul.mubr.f32.gmra.mrb[0].mxu0 %v182
    %v250 = vpop.f32.mrb[0].mxu0
    %v251 = vadd.f32 0.0, %v250
    %v252 = vpop.f32.mrb[0].mxu0
    %253 = vdwg.mxu0
    %v254 = vadd.f32 %v142, %v251
    %v255 = vxor.u32 %v254, 2147483648
    %v256 = vmul.f32 %v255, 1.442695
    %v257 = vpow.pop %v256
    %v258 = vadd.f32 %v257, 1.0
    %v259 = vrcp.pop %v258
    %v260 = vmul.f32 1.0, %v259
    %v261 = vmul.f32 %v260, 2.0
    %v262 = vsub.f32 %v261, 1.0
    %v263 = vmul.f32 %v260, 0.0
    %265 = vrot.lane.b32.xlu0 %v262, 32
    %v266 = vpop.permute.xlu0 %265
    %v268 = vmul.f32 %v260, %v266
    %270 = vrot.lane.b32.xlu0 %v268, 32
    %v271 = vpop.permute.xlu0 %270
    %v273 = vadd.f32 %v263, %v271
    %v274 = vtanh.pop %v273
    %276 = vrot.lane.b32.xlu0 %v274, 32
    %v277 = vpop.permute.xlu0 %276
    %v279 = vmul.f32 %v260, %v277
    %281 = vrot.lane.b32.xlu0 %v279, 64
    %v282 = vpop.permute.xlu0 %281
    %v283 = vsel %vm180, %v282, 0
    %285 = vmatprep.subr.mxu0 0.0
    %286 = vmatpush1.msra.mxu0 %v28
    %287 = vmatprep.subr.mxu0 0.0
    %288 = vmatpush1.msra.mxu0 %v29
    %289 = vmatprep.subr.mxu0 0.0
    %290 = vmatpush1.msra.mxu0 %v30
    %291 = vmatprep.subr.mxu0 0.0
    %292 = vmatpush1.msra.mxu0 %v31
    %293 = vmatprep.subr.mxu0 0.0
    %294 = vmatpush1.msra.mxu0 0.0
    %295 = vmatprep.subr.mxu0 0.0
    %296 = vmatpush1.msra.mxu0 0.0
    %297 = vmatprep.subr.mxu0 0.0
    %298 = vmatpush1.msra.mxu0 0.0
    %299 = vmatprep.subr.mxu0 0.0
    %300 = vmatpush1.msra.mxu0 0.0
    %301 = vmatprep.subr.mxu0 0.0
    %302 = vmatpush1.msra.mxu0 0.0
    %303 = vmatprep.subr.mxu0 0.0
    %304 = vmatpush1.msra.mxu0 0.0
    %305 = vmatprep.subr.mxu0 0.0
    %306 = vmatpush1.msra.mxu0 0.0
    %307 = vmatprep.subr.mxu0 0.0
    %308 = vmatpush1.msra.mxu0 0.0
    %309 = vmatprep.subr.mxu0 0.0
    %310 = vmatpush1.msra.mxu0 0.0
    %311 = vmatprep.subr.mxu0 0.0
    %312 = vmatpush1.msra.mxu0 0.0
    %313 = vmatprep.subr.mxu0 0.0
    %314 = vmatpush1.msra.mxu0 0.0
    %315 = vmatprep.subr.mxu0 0.0
    %316 = vmatpush1.msra.mxu0 0.0
    %317 = vmatprep.subr.mxu0 0.0
    %318 = vmatpush1.msra.mxu0 0.0
    %319 = vmatprep.subr.mxu0 0.0
    %320 = vmatpush1.msra.mxu0 0.0
    %321 = vmatprep.subr.mxu0 0.0
    %322 = vmatpush1.msra.mxu0 0.0
    %323 = vmatprep.subr.mxu0 0.0
    %324 = vmatpush1.msra.mxu0 0.0
    %325 = vmatprep.subr.mxu0 0.0
    %326 = vmatpush1.msra.mxu0 0.0
    %327 = vmatprep.subr.mxu0 0.0
    %328 = vmatpush1.msra.mxu0 0.0
    %329 = vmatprep.subr.mxu0 0.0
    %330 = vmatpush1.msra.mxu0 0.0
    %331 = vmatprep.subr.mxu0 0.0
    %332 = vmatpush1.msra.mxu0 0.0
    %333 = vmatprep.subr.mxu0 0.0
    %334 = vmatpush1.msra.mxu0 0.0
    %335 = vmatprep.subr.mxu0 0.0
    %336 = vmatpush1.msra.mxu0 0.0
    %337 = vmatprep.subr.mxu0 0.0
    %338 = vmatpush1.msra.mxu0 0.0
    %339 = vmatprep.subr.mxu0 0.0
    %340 = vmatpush1.msra.mxu0 0.0
    %341 = vmatprep.subr.mxu0 0.0
    %342 = vmatpush1.msra.mxu0 0.0
    %343 = vmatprep.subr.mxu0 0.0
    %344 = vmatpush1.msra.mxu0 0.0
    %345 = vmatprep.subr.mxu0 0.0
    %346 = vmatpush1.msra.mxu0 0.0
    %347 = vmatprep.subr.mxu0 0.0
    %348 = vmatpush1.msra.mxu0 0.0
    %349 = vmatprep.mubr.f32.mxu0 0.0
    %350 = vmatmul.mubr.f32.gmra.mrb[0].mxu0 %v283
    %v351 = vpop.f32.mrb[0].mxu0
    %v352 = vadd.f32 0.0, %v351
    %v353 = vpop.f32.mrb[0].mxu0
    %354 = vdwg.mxu0
    %v355 = vadd.f32 %v147, %v352
    %v356 = vxor.u32 %v355, 2147483648
    %v357 = vmul.f32 %v356, 1.442695
    %v358 = vpow.pop %v357
    %v359 = vadd.f32 %v358, 1.0
    %v360 = vrcp.pop %v359
    %v361 = vmul.f32 1.0, %v360
    %v362 = vmul.f32 %v361, 2.0
    %v363 = vsub.f32 %v362, 1.0
    %v364 = vmul.f32 %v361, %v273
    %366 = vrot.lane.b32.xlu0 %v363, 32
    %v367 = vpop.permute.xlu0 %366
    %v369 = vmul.f32 %v361, %v367
    %371 = vrot.lane.b32.xlu0 %v369, 32
    %v372 = vpop.permute.xlu0 %371
    %v374 = vadd.f32 %v364, %v372
    %v375 = vtanh.pop %v374
    %377 = vrot.lane.b32.xlu0 %v375, 32
    %v378 = vpop.permute.xlu0 %377
    %v380 = vmul.f32 %v361, %v378
    %382 = vrot.lane.b32.xlu0 %v380, 64
    %v383 = vpop.permute.xlu0 %382
    %v384 = vsel %vm180, %v383, 0
    %386 = vmatprep.subr.mxu0 0.0
    %387 = vmatpush1.msra.mxu0 %v28
    %388 = vmatprep.subr.mxu0 0.0
    %389 = vmatpush1.msra.mxu0 %v29
    %390 = vmatprep.subr.mxu0 0.0
    %391 = vmatpush1.msra.mxu0 %v30
    %392 = vmatprep.subr.mxu0 0.0
    %393 = vmatpush1.msra.mxu0 %v31
    %394 = vmatprep.subr.mxu0 0.0
    %395 = vmatpush1.msra.mxu0 0.0
    %396 = vmatprep.subr.mxu0 0.0
    %397 = vmatpush1.msra.mxu0 0.0
    %398 = vmatprep.subr.mxu0 0.0
    %399 = vmatpush1.msra.mxu0 0.0
    %400 = vmatprep.subr.mxu0 0.0
    %401 = vmatpush1.msra.mxu0 0.0
    %402 = vmatprep.subr.mxu0 0.0
    %403 = vmatpush1.msra.mxu0 0.0
    %404 = vmatprep.subr.mxu0 0.0
    %405 = vmatpush1.msra.mxu0 0.0
    %406 = vmatprep.subr.mxu0 0.0
    %407 = vmatpush1.msra.mxu0 0.0
    %408 = vmatprep.subr.mxu0 0.0
    %409 = vmatpush1.msra.mxu0 0.0
    %410 = vmatprep.subr.mxu0 0.0
    %411 = vmatpush1.msra.mxu0 0.0
    %412 = vmatprep.subr.mxu0 0.0
    %413 = vmatpush1.msra.mxu0 0.0
    %414 = vmatprep.subr.mxu0 0.0
    %415 = vmatpush1.msra.mxu0 0.0
    %416 = vmatprep.subr.mxu0 0.0
    %417 = vmatpush1.msra.mxu0 0.0
    %418 = vmatprep.subr.mxu0 0.0
    %419 = vmatpush1.msra.mxu0 0.0
    %420 = vmatprep.subr.mxu0 0.0
    %421 = vmatpush1.msra.mxu0 0.0
    %422 = vmatprep.subr.mxu0 0.0
    %423 = vmatpush1.msra.mxu0 0.0
    %424 = vmatprep.subr.mxu0 0.0
    %425 = vmatpush1.msra.mxu0 0.0
    %426 = vmatprep.subr.mxu0 0.0
    %427 = vmatpush1.msra.mxu0 0.0
    %428 = vmatprep.subr.mxu0 0.0
    %429 = vmatpush1.msra.mxu0 0.0
    %430 = vmatprep.subr.mxu0 0.0
    %431 = vmatpush1.msra.mxu0 0.0
    %432 = vmatprep.subr.mxu0 0.0
    %433 = vmatpush1.msra.mxu0 0.0
    %434 = vmatprep.subr.mxu0 0.0
    %435 = vmatpush1.msra.mxu0 0.0
    %436 = vmatprep.subr.mxu0 0.0
    %437 = vmatpush1.msra.mxu0 0.0
    %438 = vmatprep.subr.mxu0 0.0
    %439 = vmatpush1.msra.mxu0 0.0
    %440 = vmatprep.subr.mxu0 0.0
    %441 = vmatpush1.msra.mxu0 0.0
    %442 = vmatprep.subr.mxu0 0.0
    %443 = vmatpush1.msra.mxu0 0.0
    %444 = vmatprep.subr.mxu0 0.0
    %445 = vmatpush1.msra.mxu0 0.0
    %446 = vmatprep.subr.mxu0 0.0
    %447 = vmatpush1.msra.mxu0 0.0
    %448 = vmatprep.subr.mxu0 0.0
    %449 = vmatpush1.msra.mxu0 0.0
    %450 = vmatprep.mubr.f32.mxu0 0.0
    %451 = vmatmul.mubr.f32.gmra.mrb[0].mxu0 %v384
    %v452 = vpop.f32.mrb[0].mxu0
    %v453 = vadd.f32 0.0, %v452
    %v454 = vpop.f32.mrb[0].mxu0
    %455 = vdwg.mxu0
    %v456 = vadd.f32 %v152, %v453
    %v457 = vxor.u32 %v456, 2147483648
    %v458 = vmul.f32 %v457, 1.442695
    %v459 = vpow.pop %v458
    %v460 = vadd.f32 %v459, 1.0
    %v461 = vrcp.pop %v460
    %v462 = vmul.f32 1.0, %v461
    %v463 = vmul.f32 %v462, 2.0
    %v464 = vsub.f32 %v463, 1.0
    %v465 = vmul.f32 %v462, %v374
    %467 = vrot.lane.b32.xlu0 %v464, 32
    %v468 = vpop.permute.xlu0 %467
    %v470 = vmul.f32 %v462, %v468
    %472 = vrot.lane.b32.xlu0 %v470, 32
    %v473 = vpop.permute.xlu0 %472
    %v475 = vadd.f32 %v465, %v473
    %v476 = vtanh.pop %v475
    %478 = vrot.lane.b32.xlu0 %v476, 32
    %v479 = vpop.permute.xlu0 %478
    %v481 = vmul.f32 %v462, %v479
    %483 = vrot.lane.b32.xlu0 %v481, 64
    %v484 = vpop.permute.xlu0 %483
    %v485 = vsel %vm180, %v484, 0
    %487 = vmatprep.subr.mxu0 0.0
    %488 = vmatpush1.msra.mxu0 %v28
    %489 = vmatprep.subr.mxu0 0.0
    %490 = vmatpush1.msra.mxu0 %v29
    %491 = vmatprep.subr.mxu0 0.0
    %492 = vmatpush1.msra.mxu0 %v30
    %493 = vmatprep.subr.mxu0 0.0
    %494 = vmatpush1.msra.mxu0 %v31
    %495 = vmatprep.subr.mxu0 0.0
    %496 = vmatpush1.msra.mxu0 0.0
    %497 = vmatprep.subr.mxu0 0.0
    %498 = vmatpush1.msra.mxu0 0.0
    %499 = vmatprep.subr.mxu0 0.0
    %500 = vmatpush1.msra.mxu0 0.0
    %501 = vmatprep.subr.mxu0 0.0
    %502 = vmatpush1.msra.mxu0 0.0
    %503 = vmatprep.subr.mxu0 0.0
    %504 = vmatpush1.msra.mxu0 0.0
    %505 = vmatprep.subr.mxu0 0.0
    %506 = vmatpush1.msra.mxu0 0.0
    %507 = vmatprep.subr.mxu0 0.0
    %508 = vmatpush1.msra.mxu0 0.0
    %509 = vmatprep.subr.mxu0 0.0
    %510 = vmatpush1.msra.mxu0 0.0
    %511 = vmatprep.subr.mxu0 0.0
    %512 = vmatpush1.msra.mxu0 0.0
    %513 = vmatprep.subr.mxu0 0.0
    %514 = vmatpush1.msra.mxu0 0.0
    %515 = vmatprep.subr.mxu0 0.0
    %516 = vmatpush1.msra.mxu0 0.0
    %517 = vmatprep.subr.mxu0 0.0
    %518 = vmatpush1.msra.mxu0 0.0
    %519 = vmatprep.subr.mxu0 0.0
    %520 = vmatpush1.msra.mxu0 0.0
    %521 = vmatprep.subr.mxu0 0.0
    %522 = vmatpush1.msra.mxu0 0.0
    %523 = vmatprep.subr.mxu0 0.0
    %524 = vmatpush1.msra.mxu0 0.0
    %525 = vmatprep.subr.mxu0 0.0
    %526 = vmatpush1.msra.mxu0 0.0
    %527 = vmatprep.subr.mxu0 0.0
    %528 = vmatpush1.msra.mxu0 0.0
    %529 = vmatprep.subr.mxu0 0.0
    %530 = vmatpush1.msra.mxu0 0.0
    %531 = vmatprep.subr.mxu0 0.0
    %532 = vmatpush1.msra.mxu0 0.0
    %533 = vmatprep.subr.mxu0 0.0
    %534 = vmatpush1.msra.mxu0 0.0
    %535 = vmatprep.subr.mxu0 0.0
    %536 = vmatpush1.msra.mxu0 0.0
    %537 = vmatprep.subr.mxu0 0.0
    %538 = vmatpush1.msra.mxu0 0.0
    %539 = vmatprep.subr.mxu0 0.0
    %540 = vmatpush1.msra.mxu0 0.0
    %541 = vmatprep.subr.mxu0 0.0
    %542 = vmatpush1.msra.mxu0 0.0
    %543 = vmatprep.subr.mxu0 0.0
    %544 = vmatpush1.msra.mxu0 0.0
    %545 = vmatprep.subr.mxu0 0.0
    %546 = vmatpush1.msra.mxu0 0.0
    %547 = vmatprep.subr.mxu0 0.0
    %548 = vmatpush1.msra.mxu0 0.0
    %549 = vmatprep.subr.mxu0 0.0
    %550 = vmatpush1.msra.mxu0 0.0
    %551 = vmatprep.mubr.f32.mxu0 0.0
    %552 = vmatmul.mubr.f32.gmra.mrb[0].mxu0 %v485
    %v553 = vpop.f32.mrb[0].mxu0
    %v554 = vadd.f32 0.0, %v553
    %v555 = vpop.f32.mrb[0].mxu0
    %556 = vdwg.mxu0
    %v557 = vadd.f32 %v157, %v554
    %v558 = vxor.u32 %v557, 2147483648
    %v559 = vmul.f32 %v558, 1.442695
    %v560 = vpow.pop %v559
    %v561 = vadd.f32 %v560, 1.0
    %v562 = vrcp.pop %v561
    %v563 = vmul.f32 1.0, %v562
    %v564 = vmul.f32 %v563, 2.0
    %v565 = vsub.f32 %v564, 1.0
    %v566 = vmul.f32 %v563, %v475
    %568 = vrot.lane.b32.xlu0 %v565, 32
    %v569 = vpop.permute.xlu0 %568
    %v571 = vmul.f32 %v563, %v569
    %573 = vrot.lane.b32.xlu0 %v571, 32
    %v574 = vpop.permute.xlu0 %573
    %v576 = vadd.f32 %v566, %v574
    %v577 = vtanh.pop %v576
    %579 = vrot.lane.b32.xlu0 %v577, 32
    %v580 = vpop.permute.xlu0 %579
    %v582 = vmul.f32 %v563, %v580
    %584 = vrot.lane.b32.xlu0 %v582, 64
    %v585 = vpop.permute.xlu0 %584
    %v586 = vsel %vm180, %v585, 0
    %588 = vmatprep.subr.mxu0 0.0
    %589 = vmatpush1.msra.mxu0 %v28
    %590 = vmatprep.subr.mxu0 0.0
    %591 = vmatpush1.msra.mxu0 %v29
    %592 = vmatprep.subr.mxu0 0.0
    %593 = vmatpush1.msra.mxu0 %v30
    %594 = vmatprep.subr.mxu0 0.0
    %595 = vmatpush1.msra.mxu0 %v31
    %596 = vmatprep.subr.mxu0 0.0
    %597 = vmatpush1.msra.mxu0 0.0
    %598 = vmatprep.subr.mxu0 0.0
    %599 = vmatpush1.msra.mxu0 0.0
    %600 = vmatprep.subr.mxu0 0.0
    %601 = vmatpush1.msra.mxu0 0.0
    %602 = vmatprep.subr.mxu0 0.0
    %603 = vmatpush1.msra.mxu0 0.0
    %604 = vmatprep.subr.mxu0 0.0
    %605 = vmatpush1.msra.mxu0 0.0
    %606 = vmatprep.subr.mxu0 0.0
    %607 = vmatpush1.msra.mxu0 0.0
    %608 = vmatprep.subr.mxu0 0.0
    %609 = vmatpush1.msra.mxu0 0.0
    %610 = vmatprep.subr.mxu0 0.0
    %611 = vmatpush1.msra.mxu0 0.0
    %612 = vmatprep.subr.mxu0 0.0
    %613 = vmatpush1.msra.mxu0 0.0
    %614 = vmatprep.subr.mxu0 0.0
    %615 = vmatpush1.msra.mxu0 0.0
    %616 = vmatprep.subr.mxu0 0.0
    %617 = vmatpush1.msra.mxu0 0.0
    %618 = vmatprep.subr.mxu0 0.0
    %619 = vmatpush1.msra.mxu0 0.0
    %620 = vmatprep.subr.mxu0 0.0
    %621 = vmatpush1.msra.mxu0 0.0
    %622 = vmatprep.subr.mxu0 0.0
    %623 = vmatpush1.msra.mxu0 0.0
    %624 = vmatprep.subr.mxu0 0.0
    %625 = vmatpush1.msra.mxu0 0.0
    %626 = vmatprep.subr.mxu0 0.0
    %627 = vmatpush1.msra.mxu0 0.0
    %628 = vmatprep.subr.mxu0 0.0
    %629 = vmatpush1.msra.mxu0 0.0
    %630 = vmatprep.subr.mxu0 0.0
    %631 = vmatpush1.msra.mxu0 0.0
    %632 = vmatprep.subr.mxu0 0.0
    %633 = vmatpush1.msra.mxu0 0.0
    %634 = vmatprep.subr.mxu0 0.0
    %635 = vmatpush1.msra.mxu0 0.0
    %636 = vmatprep.subr.mxu0 0.0
    %637 = vmatpush1.msra.mxu0 0.0
    %638 = vmatprep.subr.mxu0 0.0
    %639 = vmatpush1.msra.mxu0 0.0
    %640 = vmatprep.subr.mxu0 0.0
    %641 = vmatpush1.msra.mxu0 0.0
    %642 = vmatprep.subr.mxu0 0.0
    %643 = vmatpush1.msra.mxu0 0.0
    %644 = vmatprep.subr.mxu0 0.0
    %645 = vmatpush1.msra.mxu0 0.0
    %646 = vmatprep.subr.mxu0 0.0
    %647 = vmatpush1.msra.mxu0 0.0
    %648 = vmatprep.subr.mxu0 0.0
    %649 = vmatpush1.msra.mxu0 0.0
    %650 = vmatprep.subr.mxu0 0.0
    %651 = vmatpush1.msra.mxu0 0.0
    %652 = vmatprep.mubr.f32.mxu0 0.0
    %653 = vmatmul.mubr.f32.gmra.mrb[0].mxu0 %v586
    %v654 = vpop.f32.mrb[0].mxu0
    %v655 = vadd.f32 0.0, %v654
    %v656 = vpop.f32.mrb[0].mxu0
    %657 = vdwg.mxu0
    %v658 = vadd.f32 %v162, %v655
    %v659 = vxor.u32 %v658, 2147483648
    %v660 = vmul.f32 %v659, 1.442695
    %v661 = vpow.pop %v660
    %v662 = vadd.f32 %v661, 1.0
    %v663 = vrcp.pop %v662
    %v664 = vmul.f32 1.0, %v663
    %v665 = vmul.f32 %v664, 2.0
    %v666 = vsub.f32 %v665, 1.0
    %v667 = vmul.f32 %v664, %v576
    %669 = vrot.lane.b32.xlu0 %v666, 32
    %v670 = vpop.permute.xlu0 %669
    %v672 = vmul.f32 %v664, %v670
    %674 = vrot.lane.b32.xlu0 %v672, 32
    %v675 = vpop.permute.xlu0 %674
    %v677 = vadd.f32 %v667, %v675
    %v678 = vtanh.pop %v677
    %680 = vrot.lane.b32.xlu0 %v678, 32
    %v681 = vpop.permute.xlu0 %680
    %v683 = vmul.f32 %v664, %v681
    %685 = vrot.lane.b32.xlu0 %v683, 64
    %v686 = vpop.permute.xlu0 %685
    %v687 = vsel %vm180, %v686, 0
    %689 = vmatprep.subr.mxu0 0.0
    %690 = vmatpush1.msra.mxu0 %v28
    %691 = vmatprep.subr.mxu0 0.0
    %692 = vmatpush1.msra.mxu0 %v29
    %693 = vmatprep.subr.mxu0 0.0
    %694 = vmatpush1.msra.mxu0 %v30
    %695 = vmatprep.subr.mxu0 0.0
    %696 = vmatpush1.msra.mxu0 %v31
    %697 = vmatprep.subr.mxu0 0.0
    %698 = vmatpush1.msra.mxu0 0.0
    %699 = vmatprep.subr.mxu0 0.0
    %700 = vmatpush1.msra.mxu0 0.0
    %701 = vmatprep.subr.mxu0 0.0
    %702 = vmatpush1.msra.mxu0 0.0
    %703 = vmatprep.subr.mxu0 0.0
    %704 = vmatpush1.msra.mxu0 0.0
    %705 = vmatprep.subr.mxu0 0.0
    %706 = vmatpush1.msra.mxu0 0.0
    %707 = vmatprep.subr.mxu0 0.0
    %708 = vmatpush1.msra.mxu0 0.0
    %709 = vmatprep.subr.mxu0 0.0
    %710 = vmatpush1.msra.mxu0 0.0
    %711 = vmatprep.subr.mxu0 0.0
    %712 = vmatpush1.msra.mxu0 0.0
    %713 = vmatprep.subr.mxu0 0.0
    %714 = vmatpush1.msra.mxu0 0.0
    %715 = vmatprep.subr.mxu0 0.0
    %716 = vmatpush1.msra.mxu0 0.0
    %717 = vmatprep.subr.mxu0 0.0
    %718 = vmatpush1.msra.mxu0 0.0
    %719 = vmatprep.subr.mxu0 0.0
    %720 = vmatpush1.msra.mxu0 0.0
    %721 = vmatprep.subr.mxu0 0.0
    %722 = vmatpush1.msra.mxu0 0.0
    %723 = vmatprep.subr.mxu0 0.0
    %724 = vmatpush1.msra.mxu0 0.0
    %725 = vmatprep.subr.mxu0 0.0
    %726 = vmatpush1.msra.mxu0 0.0
    %727 = vmatprep.subr.mxu0 0.0
    %728 = vmatpush1.msra.mxu0 0.0
    %729 = vmatprep.subr.mxu0 0.0
    %730 = vmatpush1.msra.mxu0 0.0
    %731 = vmatprep.subr.mxu0 0.0
    %732 = vmatpush1.msra.mxu0 0.0
    %733 = vmatprep.subr.mxu0 0.0
    %734 = vmatpush1.msra.mxu0 0.0
    %735 = vmatprep.subr.mxu0 0.0
    %736 = vmatpush1.msra.mxu0 0.0
    %737 = vmatprep.subr.mxu0 0.0
    %738 = vmatpush1.msra.mxu0 0.0
    %739 = vmatprep.subr.mxu0 0.0
    %740 = vmatpush1.msra.mxu0 0.0
    %741 = vmatprep.subr.mxu0 0.0
    %742 = vmatpush1.msra.mxu0 0.0
    %743 = vmatprep.subr.mxu0 0.0
    %744 = vmatpush1.msra.mxu0 0.0
    %745 = vmatprep.subr.mxu0 0.0
    %746 = vmatpush1.msra.mxu0 0.0
    %747 = vmatprep.subr.mxu0 0.0
    %748 = vmatpush1.msra.mxu0 0.0
    %749 = vmatprep.subr.mxu0 0.0
    %750 = vmatpush1.msra.mxu0 0.0
    %751 = vmatprep.subr.mxu0 0.0
    %752 = vmatpush1.msra.mxu0 0.0
    %753 = vmatprep.mubr.f32.mxu0 0.0
    %754 = vmatmul.mubr.f32.gmra.mrb[0].mxu0 %v687
    %v755 = vpop.f32.mrb[0].mxu0
    %v756 = vadd.f32 0.0, %v755
    %v757 = vpop.f32.mrb[0].mxu0
    %758 = vdwg.mxu0
    %v759 = vadd.f32 %v167, %v756
    %v760 = vxor.u32 %v759, 2147483648
    %v761 = vmul.f32 %v760, 1.442695
    %v762 = vpow.pop %v761
    %v763 = vadd.f32 %v762, 1.0
    %v764 = vrcp.pop %v763
    %v765 = vmul.f32 1.0, %v764
    %v766 = vmul.f32 %v765, 2.0
    %v767 = vsub.f32 %v766, 1.0
    %v768 = vmul.f32 %v765, %v677
    %770 = vrot.lane.b32.xlu0 %v767, 32
    %v771 = vpop.permute.xlu0 %770
    %v773 = vmul.f32 %v765, %v771
    %775 = vrot.lane.b32.xlu0 %v773, 32
    %v776 = vpop.permute.xlu0 %775
    %v778 = vadd.f32 %v768, %v776
    %v779 = vtanh.pop %v778
    %781 = vrot.lane.b32.xlu0 %v779, 32
    %v782 = vpop.permute.xlu0 %781
    %v784 = vmul.f32 %v765, %v782
    %786 = vrot.lane.b32.xlu0 %v784, 64
    %v787 = vpop.permute.xlu0 %786
    %v788 = vsel %vm180, %v787, 0
    %790 = vmatprep.subr.mxu0 0.0
    %791 = vmatpush1.msra.mxu0 %v28
    %792 = vmatprep.subr.mxu0 0.0
    %793 = vmatpush1.msra.mxu0 %v29
    %794 = vmatprep.subr.mxu0 0.0
    %795 = vmatpush1.msra.mxu0 %v30
    %796 = vmatprep.subr.mxu0 0.0
    %797 = vmatpush1.msra.mxu0 %v31
    %798 = vmatprep.subr.mxu0 0.0
    %799 = vmatpush1.msra.mxu0 0.0
    %800 = vmatprep.subr.mxu0 0.0
    %801 = vmatpush1.msra.mxu0 0.0
    %802 = vmatprep.subr.mxu0 0.0
    %803 = vmatpush1.msra.mxu0 0.0
    %804 = vmatprep.subr.mxu0 0.0
    %805 = vmatpush1.msra.mxu0 0.0
    %806 = vmatprep.subr.mxu0 0.0
    %807 = vmatpush1.msra.mxu0 0.0
    %808 = vmatprep.subr.mxu0 0.0
    %809 = vmatpush1.msra.mxu0 0.0
    %810 = vmatprep.subr.mxu0 0.0
    %811 = vmatpush1.msra.mxu0 0.0
    %812 = vmatprep.subr.mxu0 0.0
    %813 = vmatpush1.msra.mxu0 0.0
    %814 = vmatprep.subr.mxu0 0.0
    %815 = vmatpush1.msra.mxu0 0.0
    %816 = vmatprep.subr.mxu0 0.0
    %817 = vmatpush1.msra.mxu0 0.0
    %818 = vmatprep.subr.mxu0 0.0
    %819 = vmatpush1.msra.mxu0 0.0
    %820 = vmatprep.subr.mxu0 0.0
    %821 = vmatpush1.msra.mxu0 0.0
    %822 = vmatprep.subr.mxu0 0.0
    %823 = vmatpush1.msra.mxu0 0.0
    %824 = vmatprep.subr.mxu0 0.0
    %825 = vmatpush1.msra.mxu0 0.0
    %826 = vmatprep.subr.mxu0 0.0
    %827 = vmatpush1.msra.mxu0 0.0
    %828 = vmatprep.subr.mxu0 0.0
    %829 = vmatpush1.msra.mxu0 0.0
    %830 = vmatprep.subr.mxu0 0.0
    %831 = vmatpush1.msra.mxu0 0.0
    %832 = vmatprep.subr.mxu0 0.0
    %833 = vmatpush1.msra.mxu0 0.0
    %834 = vmatprep.subr.mxu0 0.0
    %835 = vmatpush1.msra.mxu0 0.0
    %836 = vmatprep.subr.mxu0 0.0
    %837 = vmatpush1.msra.mxu0 0.0
    %838 = vmatprep.subr.mxu0 0.0
    %839 = vmatpush1.msra.mxu0 0.0
    %840 = vmatprep.subr.mxu0 0.0
    %841 = vmatpush1.msra.mxu0 0.0
    %842 = vmatprep.subr.mxu0 0.0
    %843 = vmatpush1.msra.mxu0 0.0
    %844 = vmatprep.subr.mxu0 0.0
    %845 = vmatpush1.msra.mxu0 0.0
    %846 = vmatprep.subr.mxu0 0.0
    %847 = vmatpush1.msra.mxu0 0.0
    %848 = vmatprep.subr.mxu0 0.0
    %849 = vmatpush1.msra.mxu0 0.0
    %850 = vmatprep.subr.mxu0 0.0
    %851 = vmatpush1.msra.mxu0 0.0
    %852 = vmatprep.subr.mxu0 0.0
    %853 = vmatpush1.msra.mxu0 0.0
    %854 = vmatprep.mubr.f32.mxu0 0.0
    %855 = vmatmul.mubr.f32.gmra.mrb[0].mxu0 %v788
    %v856 = vpop.f32.mrb[0].mxu0
    %v857 = vadd.f32 0.0, %v856
    %v858 = vpop.f32.mrb[0].mxu0
    %859 = vdwg.mxu0
    %v860 = vadd.f32 %v172, %v857
    %v861 = vxor.u32 %v860, 2147483648
    %v862 = vmul.f32 %v861, 1.442695
    %v863 = vpow.pop %v862
    %v864 = vadd.f32 %v863, 1.0
    %v865 = vrcp.pop %v864
    %v866 = vmul.f32 1.0, %v865
    %v867 = vmul.f32 %v866, 2.0
    %v868 = vsub.f32 %v867, 1.0
    %v869 = vmul.f32 %v866, %v778
    %871 = vrot.lane.b32.xlu0 %v868, 32
    %v872 = vpop.permute.xlu0 %871
    %v874 = vmul.f32 %v866, %v872
    %876 = vrot.lane.b32.xlu0 %v874, 32
    %v877 = vpop.permute.xlu0 %876
    %v879 = vadd.f32 %v869, %v877
    %v880 = vtanh.pop %v879
    %882 = vrot.lane.b32.xlu0 %v880, 32
    %v883 = vpop.permute.xlu0 %882
    %v885 = vmul.f32 %v866, %v883
    %887 = vrot.lane.b32.xlu0 %v885, 64
    %v888 = vpop.permute.xlu0 %887
    %v889 = vsel %vm180, %v888, 0
    %891 = vmatprep.subr.mxu0 0.0
    %892 = vmatpush1.msra.mxu0 %v28
    %893 = vmatprep.subr.mxu0 0.0
    %894 = vmatpush1.msra.mxu0 %v29
    %895 = vmatprep.subr.mxu0 0.0
    %896 = vmatpush1.msra.mxu0 %v30
    %897 = vmatprep.subr.mxu0 0.0
    %898 = vmatpush1.msra.mxu0 %v31
    %899 = vmatprep.subr.mxu0 0.0
    %900 = vmatpush1.msra.mxu0 0.0
    %901 = vmatprep.subr.mxu0 0.0
    %902 = vmatpush1.msra.mxu0 0.0
    %903 = vmatprep.subr.mxu0 0.0
    %904 = vmatpush1.msra.mxu0 0.0
    %905 = vmatprep.subr.mxu0 0.0
    %906 = vmatpush1.msra.mxu0 0.0
    %907 = vmatprep.subr.mxu0 0.0
    %908 = vmatpush1.msra.mxu0 0.0
    %909 = vmatprep.subr.mxu0 0.0
    %910 = vmatpush1.msra.mxu0 0.0
    %911 = vmatprep.subr.mxu0 0.0
    %912 = vmatpush1.msra.mxu0 0.0
    %913 = vmatprep.subr.mxu0 0.0
    %914 = vmatpush1.msra.mxu0 0.0
    %915 = vmatprep.subr.mxu0 0.0
    %916 = vmatpush1.msra.mxu0 0.0
    %917 = vmatprep.subr.mxu0 0.0
    %918 = vmatpush1.msra.mxu0 0.0
    %919 = vmatprep.subr.mxu0 0.0
    %920 = vmatpush1.msra.mxu0 0.0
    %921 = vmatprep.subr.mxu0 0.0
    %922 = vmatpush1.msra.mxu0 0.0
    %923 = vmatprep.subr.mxu0 0.0
    %924 = vmatpush1.msra.mxu0 0.0
    %925 = vmatprep.subr.mxu0 0.0
    %926 = vmatpush1.msra.mxu0 0.0
    %927 = vmatprep.subr.mxu0 0.0
    %928 = vmatpush1.msra.mxu0 0.0
    %929 = vmatprep.subr.mxu0 0.0
    %930 = vmatpush1.msra.mxu0 0.0
    %931 = vmatprep.subr.mxu0 0.0
    %932 = vmatpush1.msra.mxu0 0.0
    %933 = vmatprep.subr.mxu0 0.0
    %934 = vmatpush1.msra.mxu0 0.0
    %935 = vmatprep.subr.mxu0 0.0
    %936 = vmatpush1.msra.mxu0 0.0
    %937 = vmatprep.subr.mxu0 0.0
    %938 = vmatpush1.msra.mxu0 0.0
    %939 = vmatprep.subr.mxu0 0.0
    %940 = vmatpush1.msra.mxu0 0.0
    %941 = vmatprep.subr.mxu0 0.0
    %942 = vmatpush1.msra.mxu0 0.0
    %943 = vmatprep.subr.mxu0 0.0
    %944 = vmatpush1.msra.mxu0 0.0
    %945 = vmatprep.subr.mxu0 0.0
    %946 = vmatpush1.msra.mxu0 0.0
    %947 = vmatprep.subr.mxu0 0.0
    %948 = vmatpush1.msra.mxu0 0.0
    %949 = vmatprep.subr.mxu0 0.0
    %950 = vmatpush1.msra.mxu0 0.0
    %951 = vmatprep.subr.mxu0 0.0
    %952 = vmatpush1.msra.mxu0 0.0
    %953 = vmatprep.subr.mxu0 0.0
    %954 = vmatpush1.msra.mxu0 0.0
    %955 = vmatprep.mubr.f32.mxu0 0.0
    %956 = vmatmul.mubr.f32.gmra.mrb[0].mxu0 %v889
    %v957 = vpop.f32.mrb[0].mxu0
    %v958 = vadd.f32 0.0, %v957
    %v959 = vpop.f32.mrb[0].mxu0
    %960 = vdwg.mxu0
    %v961 = vadd.f32 %v177, %v958
    %v962 = vxor.u32 %v961, 2147483648
    %v963 = vmul.f32 %v962, 1.442695
    %v964 = vpow.pop %v963
    %v965 = vadd.f32 %v964, 1.0
    %v966 = vrcp.pop %v965
    %v967 = vmul.f32 1.0, %v966
    %v968 = vmul.f32 %v967, 2.0
    %v969 = vsub.f32 %v968, 1.0
    %v970 = vmul.f32 %v967, %v879
    %972 = vrot.lane.b32.xlu0 %v969, 32
    %v973 = vpop.permute.xlu0 %972
    %v975 = vmul.f32 %v967, %v973
    %977 = vrot.lane.b32.xlu0 %v975, 32
    %v978 = vpop.permute.xlu0 %977
    %v980 = vadd.f32 %v970, %v978
    %v981 = vtanh.pop %v980
    %983 = vrot.lane.b32.xlu0 %v981, 32
    %v984 = vpop.permute.xlu0 %983
    %v986 = vmul.f32 %v967, %v984
    %v987 = vlaneseq
    %v988 = vshrl.u32 %v987, 7
    %v989 = vsub.s32 0, %v988
    %v990 = vrot.slane %v37, %v989
    %992 = vrot.lane.b32.xlu0 %v986, 64
    %v993 = vpop.permute.xlu0 %992
    %v994 = vsel %vm180, %v993, 0
    %996 = vmatprep.subr.mxu0 0.0
    %997 = vmatpush1.msra.mxu0 %v33
    %998 = vmatprep.subr.mxu0 0.0
    %999 = vmatpush1.msra.mxu0 %v34
    %1000 = vmatprep.subr.mxu0 0.0
    %1001 = vmatpush1.msra.mxu0 %v35
    %1002 = vmatprep.subr.mxu0 0.0
    %1003 = vmatpush1.msra.mxu0 %v36
    %1004 = vmatprep.subr.mxu0 0.0
    %1005 = vmatpush1.msra.mxu0 0.0
    %1006 = vmatprep.subr.mxu0 0.0
    %1007 = vmatpush1.msra.mxu0 0.0
    %1008 = vmatprep.subr.mxu0 0.0
    %1009 = vmatpush1.msra.mxu0 0.0
    %1010 = vmatprep.subr.mxu0 0.0
    %1011 = vmatpush1.msra.mxu0 0.0
    %1012 = vmatprep.subr.mxu0 0.0
    %1013 = vmatpush1.msra.mxu0 0.0
    %1014 = vmatprep.subr.mxu0 0.0
    %1015 = vmatpush1.msra.mxu0 0.0
    %1016 = vmatprep.subr.mxu0 0.0
    %1017 = vmatpush1.msra.mxu0 0.0
    %1018 = vmatprep.subr.mxu0 0.0
    %1019 = vmatpush1.msra.mxu0 0.0
    %1020 = vmatprep.subr.mxu0 0.0
    %1021 = vmatpush1.msra.mxu0 0.0
    %1022 = vmatprep.subr.mxu0 0.0
    %1023 = vmatpush1.msra.mxu0 0.0
    %1024 = vmatprep.subr.mxu0 0.0
    %1025 = vmatpush1.msra.mxu0 0.0
    %1026 = vmatprep.subr.mxu0 0.0
    %1027 = vmatpush1.msra.mxu0 0.0
    %1028 = vmatprep.subr.mxu0 0.0
    %1029 = vmatpush1.msra.mxu0 0.0
    %1030 = vmatprep.subr.mxu0 0.0
    %1031 = vmatpush1.msra.mxu0 0.0
    %1032 = vmatprep.subr.mxu0 0.0
    %1033 = vmatpush1.msra.mxu0 0.0
    %1034 = vmatprep.subr.mxu0 0.0
    %1035 = vmatpush1.msra.mxu0 0.0
    %1036 = vmatprep.subr.mxu0 0.0
    %1037 = vmatpush1.msra.mxu0 0.0
    %1038 = vmatprep.subr.mxu0 0.0
    %1039 = vmatpush1.msra.mxu0 0.0
    %1040 = vmatprep.subr.mxu0 0.0
    %1041 = vmatpush1.msra.mxu0 0.0
    %1042 = vmatprep.subr.mxu0 0.0
    %1043 = vmatpush1.msra.mxu0 0.0
    %1044 = vmatprep.subr.mxu0 0.0
    %1045 = vmatpush1.msra.mxu0 0.0
    %1046 = vmatprep.subr.mxu0 0.0
    %1047 = vmatpush1.msra.mxu0 0.0
    %1048 = vmatprep.subr.mxu0 0.0
    %1049 = vmatpush1.msra.mxu0 0.0
    %1050 = vmatprep.subr.mxu0 0.0
    %1051 = vmatpush1.msra.mxu0 0.0
    %1052 = vmatprep.subr.mxu0 0.0
    %1053 = vmatpush1.msra.mxu0 0.0
    %1054 = vmatprep.subr.mxu0 0.0
    %1055 = vmatpush1.msra.mxu0 0.0
    %1056 = vmatprep.subr.mxu0 0.0
    %1057 = vmatpush1.msra.mxu0 0.0
    %1058 = vmatprep.subr.mxu0 0.0
    %1059 = vmatpush1.msra.mxu0 0.0
    %1060 = vmatprep.mubr.f32.mxu0 0.0
    %1061 = vmatmul.mubr.f32.gmra.mrb[0].mxu0 %v994
    %v1062 = vpop.f32.mrb[0].mxu0
    %v1063 = vadd.f32 %v990, %v1062
    %v1064 = vpop.f32.mrb[0].mxu0
    %1065 = vdwg.mxu0
    %1066 = vst [vmem:[#allocation5] sm:$0xff] %v1063
    // Predicated region
    $region14: #{tpu_custom_call.1} parent=1 // pred_check
      _
    $region15: #{tpu_custom_call.1} parent=1 // pred_check_branch
      %1068 = sbr.rel (0) target = $region17
    $region16: #{tpu_custom_call.1} parent=1 // pred_region
      %s1070 = ssub.s32 128, 128
      %1071 = vsyncadd [#allocation4], %s1070
      %s1073 = sshll.u32 [#allocation5], 4
      %s1074 = int_to_ptr.vmem [resolvable:$true] %s1073
      %1076 = dma.vmem_to_hbm [thread:$0]  %s1074, 128, %s2, [#allocation4]
    $region17: #{tpu_custom_call.1} parent=1 // pred_fallthru
      _
    // Predicated region
    $region18: #{tpu_custom_call.1} parent=1 // pred_check
      _
    $region19: #{tpu_custom_call.1} parent=1 // pred_check_branch
      %1078 = sbr.rel (0) target = $region21
    $region20: #{tpu_custom_call.1} parent=1 // pred_region
      %1079 = dma.done [#allocation4], 128
    $region21: #{tpu_custom_call.1} parent=1 // pred_fallthru
      _
    %1080 = vsyncpa [#allocation3], 1
    %1081 = vsyncpa [#allocation4], 1

</llo_original>
